<compile_context>
chip_gen: v6e
topology: v6e:2x2x1
jax: 0.10.0
libtpu: 0.0.40
codegen_flags: <defaults>
</compile_context>

<pallas_src>
import functools

import jax
import jax.numpy as jnp
from jax import lax
from jax.experimental import pallas as pl
from jax.experimental.pallas import tpu as pltpu

LANE = 128                      # lane width (last dim maps to the 128-lane axis)
TM = 2048                       # rows per streamed block -> 1 MiB f32 per input per step
NC = 2                          # reduction shards ("parallel" axis; both TCs on v7x)
FAST_ROWS = 8192                # <= 4 MiB per array -> single fused kernel
VMEM_LIMIT = 32 * 1024 * 1024   # explicit scoped-VMEM budget (v5e default is only 16 MiB)


# ----------------------------------------------------------------------------
# Kernels
# ----------------------------------------------------------------------------
def _fused_kernel(scal_ref, p_ref, m_ref, v_ref, out_ref):
    """Whole tensor resident in VMEM: norms + update in one pass."""
    lr = scal_ref[0]
    eps = scal_ref[1]
    p = p_ref[...]
    r = m_ref[...] / (jnp.sqrt(v_ref[...]) + eps)
    trust = jnp.sqrt(jnp.sum(p * p)) / (jnp.sqrt(jnp.sum(r * r)) + eps)
    out_ref[...] = p - (lr * trust) * r


def _reduce_kernel(spc, nb, rows, eps_ref, p_ref, m_ref, v_ref, psq_ref, rsq_ref):
    """Pass 1: per-shard (1, LANE) accumulators of sum(p^2) and sum(r^2).

    grid = (NC, spc).  The output block index only depends on the parallel
    shard axis, so the (1, 1, LANE) output block stays resident across the
    'arbitrary' step axis and acts as the accumulator.  Ragged handling:
      * rows beyond `rows` in a partial last block are masked to zero,
      * overhanging steps of the last shard (blk >= nb) are skipped.
    """
    c = pl.program_id(0)
    s = pl.program_id(1)

    @pl.when(s == 0)
    def _init():
        psq_ref[...] = jnp.zeros_like(psq_ref)
        rsq_ref[...] = jnp.zeros_like(rsq_ref)

    blk = c * spc + s

    @pl.when(blk < nb)
    def _accumulate():
        eps = eps_ref[0]
        row = blk * TM + lax.broadcasted_iota(jnp.int32, (TM, LANE), 0)
        valid = row < rows
        # Mask the *inputs* (not the products) so garbage rows of a partial
        # block can never create NaN/Inf: r(m=0, v=0) == 0 exactly.
        p = jnp.where(valid, p_ref[...], 0.0)
        m = jnp.where(valid, m_ref[...], 0.0)
        v = jnp.where(valid, v_ref[...], 0.0)
        r = m / (jnp.sqrt(v) + eps)
        psq_ref[0] += jnp.sum(p * p, axis=0, keepdims=True)
        rsq_ref[0] += jnp.sum(r * r, axis=0, keepdims=True)


def _update_kernel(scal_ref, p_ref, m_ref, v_ref, out_ref):
    """Pass 2: param - (lr * trust) * r; fused scalar + eps live in SMEM.

    The last grid block may be partial; Pallas drops out-of-bounds writes, so
    garbage rows computed from stale VMEM never reach HBM.
    """
    scale = scal_ref[0]   # lr * trust_ratio, computed once in JAX
    eps = scal_ref[1]
    r = m_ref[...] / (jnp.sqrt(v_ref[...]) + eps)
    out_ref[...] = p_ref[...] - scale * r


# ----------------------------------------------------------------------------
# Wrapper
# ----------------------------------------------------------------------------
@jax.jit
def lamb_update(param, m, v, lr=0.001, eps=1e-6):
    orig_shape = param.shape
    orig_dtype = param.dtype
    n = param.size

    rows = pl.cdiv(n, LANE)
    pad = rows * LANE - n           # < 128, and 0 whenever n % 128 == 0

    def prep(x):
        x = jnp.ravel(x)
        if x.dtype != jnp.float32:
            x = x.astype(jnp.float32)   # TODO(synk): stream narrow dtypes natively
        if pad:
            x = jnp.pad(x, (0, pad))    # zeros are exact: they add 0 to both norms
        return x.reshape(rows, LANE)    # free bitcast when pad == 0

    p2, m2, v2 = prep(param), prep(m), prep(v)
    lr32 = jnp.asarray(lr, jnp.float32)
    eps32 = jnp.asarray(eps, jnp.float32)

    if rows <= FAST_ROWS:
        # --- Fused single pass: whole arrays in VMEM, no grid, no double buffer. ---
        scal = jnp.stack([lr32, eps32])
        out = pl.pallas_call(
            _fused_kernel,
            out_shape=jax.ShapeDtypeStruct((rows, LANE), jnp.float32),
            in_specs=[
                pl.BlockSpec(memory_space=pltpu.MemorySpace.SMEM),
                pl.BlockSpec(memory_space=pltpu.MemorySpace.VMEM),
                pl.BlockSpec(memory_space=pltpu.MemorySpace.VMEM),
                pl.BlockSpec(memory_space=pltpu.MemorySpace.VMEM),
            ],
            out_specs=pl.BlockSpec(memory_space=pltpu.MemorySpace.VMEM),
            compiler_params=pltpu.CompilerParams(vmem_limit_bytes=VMEM_LIMIT),
        )(scal, p2, m2, v2)
    else:
        nb = pl.cdiv(rows, TM)      # total data blocks
        spc = pl.cdiv(nb, NC)       # blocks per reduction shard

        # Clamp so overhanging steps of the last shard stay in-bounds
        # (their contribution is skipped in-kernel with pl.when).
        idx = lambda c, s: (jnp.minimum(c * spc + s, nb - 1), 0)

        # ---- Pass 1: sharded vector partial sums of p^2 and r^2. ----
        psq_parts, rsq_parts = pl.pallas_call(
            functools.partial(_reduce_kernel, spc, nb, rows),
            out_shape=(jax.ShapeDtypeStruct((NC, 1, LANE), jnp.float32),
                       jax.ShapeDtypeStruct((NC, 1, LANE), jnp.float32)),
            grid_spec=pltpu.PrefetchScalarGridSpec(
                num_scalar_prefetch=0,
                grid=(NC, spc),
                in_specs=[pl.BlockSpec(memory_space=pltpu.MemorySpace.SMEM)]
                         + [pl.BlockSpec((TM, LANE), idx)] * 3,
                out_specs=[pl.BlockSpec((1, 1, LANE), lambda c, s: (c, 0, 0))] * 2,
            ),
            compiler_params=pltpu.CompilerParams(
                dimension_semantics=("parallel", "arbitrary"),
                vmem_limit_bytes=VMEM_LIMIT,
            ),
        )(eps32.reshape(1), p2, m2, v2)

        # Tiny final reduce + trust ratio in plain JAX (done once, not per tile).
        trust = jnp.sqrt(jnp.sum(psq_parts)) / (jnp.sqrt(jnp.sum(rsq_parts)) + eps32)
        scal = jnp.stack([lr32 * trust, eps32])   # fused scalar + eps

        # ---- Pass 2: elementwise update (fully parallel, megacore-shardable). ----
        out = pl.pallas_call(
            _update_kernel,
            out_shape=jax.ShapeDtypeStruct((rows, LANE), jnp.float32),
            grid_spec=pltpu.PrefetchScalarGridSpec(
                num_scalar_prefetch=0,
                grid=(nb,),
                in_specs=[pl.BlockSpec(memory_space=pltpu.MemorySpace.SMEM)]
                         + [pl.BlockSpec((TM, LANE), lambda i: (i, 0))] * 3,
                out_specs=pl.BlockSpec((TM, LANE), lambda i: (i, 0)),
            ),
            compiler_params=pltpu.CompilerParams(
                dimension_semantics=("parallel",),
                vmem_limit_bytes=VMEM_LIMIT,
            ),
        )(scal, p2, m2, v2)

    if pad:
        out = out.reshape(-1)[:n]
    out = out.reshape(orig_shape)
    if out.dtype != orig_dtype:
        out = out.astype(orig_dtype)
    return out


def lamb_update_ref(param, m, v, lr=0.001, eps=1e-6):
    """Pure-JAX reference matching the PyTorch module exactly."""
    r = m / (jnp.sqrt(v) + eps)
    trust = jnp.linalg.norm(param.ravel()) / (jnp.linalg.norm(r.ravel()) + eps)
    return param - lr * trust * r


if __name__ == "__main__":
    key = jax.random.PRNGKey(0)
    ks = jax.random.split(key, 6)

    # Small tensor -> fused single-kernel fast path.
    shape = (2, 4, 16, 16)
    param = jax.random.normal(ks[0], shape, dtype=jnp.float32)
    m = jax.random.normal(ks[1], shape, dtype=jnp.float32)
    v = jnp.abs(jax.random.normal(ks[2], shape, dtype=jnp.float32))  # v >= 0

    out = jax.block_until_ready(lamb_update(param, m, v, 0.001, 1e-6))
    ref = lamb_update_ref(param, m, v, 0.001, 1e-6)
    assert out.shape == param.shape and out.dtype == param.dtype
    assert jnp.allclose(out, ref, atol=1e-5, rtol=1e-5), "fused path mismatch"

    # Larger, ragged tensor -> two-pass streaming path (exercises the tail pad,
    # in-kernel row masking, the clamped overhang step, the NC=2 shard and the
    # SMEM trust scalar).
    shape2 = (4_200_001,)
    param2 = jax.random.normal(ks[3], shape2, dtype=jnp.float32)
    m2 = jax.random.normal(ks[4], shape2, dtype=jnp.float32)
    v2 = jnp.abs(jax.random.normal(ks[5], shape2, dtype=jnp.float32))

    out2 = jax.block_until_ready(lamb_update(param2, m2, v2, 0.001, 1e-6))
    ref2 = lamb_update_ref(param2, m2, v2, 0.001, 1e-6)
    assert jnp.allclose(out2, ref2, atol=1e-4, rtol=1e-4), "streaming path mismatch"

    print("KERNEL_OK")
</pallas_src>

<mosaic_0001>
module attributes {stable_mosaic.version = 11 : i64} {
  func.func @_fused_kernel(%arg0: memref<2xf32, #tpu.memory_space<smem>>, %arg1: memref<16x128xf32, #tpu.memory_space<vmem>>, %arg2: memref<16x128xf32, #tpu.memory_space<vmem>>, %arg3: memref<16x128xf32, #tpu.memory_space<vmem>>, %arg4: memref<16x128xf32, #tpu.memory_space<vmem>>) attributes {dimension_semantics = [], scalar_prefetch = 0 : i64, scratch_operands = 0 : i64, tpu.core_type = #tpu.core_type<tc>} {
    %c0 = arith.constant 0 : index
    %0 = memref.load %arg0[%c0] : memref<2xf32, #tpu.memory_space<smem>>
    %c1 = arith.constant 1 : index
    %1 = memref.load %arg0[%c1] : memref<2xf32, #tpu.memory_space<smem>>
    %c0_0 = arith.constant 0 : index
    %c0_1 = arith.constant 0 : index
    %2 = vector.load %arg1[%c0_0, %c0_1] : memref<16x128xf32, #tpu.memory_space<vmem>>, vector<16x128xf32>
    %c0_2 = arith.constant 0 : index
    %c0_3 = arith.constant 0 : index
    %3 = vector.load %arg2[%c0_2, %c0_3] : memref<16x128xf32, #tpu.memory_space<vmem>>, vector<16x128xf32>
    %c0_4 = arith.constant 0 : index
    %c0_5 = arith.constant 0 : index
    %4 = vector.load %arg3[%c0_4, %c0_5] : memref<16x128xf32, #tpu.memory_space<vmem>>, vector<16x128xf32>
    %5 = math.sqrt %4 : vector<16x128xf32>
    %6 = vector.broadcast %1 : f32 to vector<16x128xf32>
    %7 = arith.addf %5, %6 : vector<16x128xf32>
    %8 = arith.divf %3, %7 : vector<16x128xf32>
    %9 = arith.mulf %2, %2 : vector<16x128xf32>
    %10 = vector.shape_cast %9 : vector<16x128xf32> to vector<1x16x128xf32>
    %cst = arith.constant dense<0.000000e+00> : vector<1xf32>
    %11 = vector.multi_reduction <add>, %10, %cst [1, 2] : vector<1x16x128xf32> to vector<1xf32>
    %12 = vector.shape_cast %11 : vector<1xf32> to vector<1x1x1xf32>
    %13 = vector.extract %12[0, 0, 0] : f32 from vector<1x1x1xf32>
    %14 = math.sqrt %13 : f32
    %15 = arith.mulf %8, %8 : vector<16x128xf32>
    %16 = vector.shape_cast %15 : vector<16x128xf32> to vector<1x16x128xf32>
    %cst_6 = arith.constant dense<0.000000e+00> : vector<1xf32>
    %17 = vector.multi_reduction <add>, %16, %cst_6 [1, 2] : vector<1x16x128xf32> to vector<1xf32>
    %18 = vector.shape_cast %17 : vector<1xf32> to vector<1x1x1xf32>
    %19 = vector.extract %18[0, 0, 0] : f32 from vector<1x1x1xf32>
    %20 = math.sqrt %19 : f32
    %21 = arith.addf %20, %1 : f32
    %22 = arith.divf %14, %21 : f32
    %23 = arith.mulf %0, %22 : f32
    %24 = vector.broadcast %23 : f32 to vector<16x128xf32>
    %25 = arith.mulf %24, %8 : vector<16x128xf32>
    %26 = arith.subf %2, %25 : vector<16x128xf32>
    %c0_7 = arith.constant 0 : index
    %c0_8 = arith.constant 0 : index
    %27 = vector.load %arg4[%c0_7, %c0_8] : memref<16x128xf32, #tpu.memory_space<vmem>>, vector<16x128xf32>
    tpu.vector_store %arg4[%c0_7, %c0_8], %26 {strides = array<i32>} : memref<16x128xf32, #tpu.memory_space<vmem>>, vector<16x128xf32>,
    return
  }
}

</mosaic_0001>

<llo_original>
// kernel: lamb_update.1
$region0: #{lamb_update.1}
  #allocation0 [shape = 'u32[]', space=smem, size = 0x4, offset = 0x4, fixed_abs, tag = 'smem constant byte address 0x4 - core index']
  #allocation1 [shape = 'u32[144,128]{1,0:T(1,128)}', space=vmem, size = 0x12000, scoped, tag = 'internal scratch']
  %s0 = inlined_call_operand.vmem [shape: f32[2], index: 0, kind: input, shape index: {}]
  %s1 = inlined_call_operand.vmem [shape: f32[16,128], index: 1, kind: input, shape index: {}]
  %s2 = inlined_call_operand.vmem [shape: f32[16,128], index: 2, kind: input, shape index: {}]
  %s3 = inlined_call_operand.vmem [shape: f32[16,128], index: 3, kind: input, shape index: {}]
  %s4 = inlined_call_operand.vmem [shape: f32[16,128], index: 4, kind: output, shape index: {}]
  %s5 = sld [smem:[#allocation0]]
  $region30: #{lamb_update.1} parent=0
    _
  %s7 = ssub.s32 1, %s5
  %s8 = scalar_select 0, %s7, %s5
  $region1: #{lamb_update.1} parent=0
    #allocation2 [shape = 'u8[512]{0}', space=smem, size = 0x200, scoped, tag = 'input window, operand 0, single buffered']
    #allocation3 [shape = 's32[1]{0}', space=sflag, size = 0x4, scoped, tag = 'scoped memory for lamb_update.1']
    %9 = vsyncpa [#allocation3], 0
    // Predicated region
    $region2: #{lamb_update.1} parent=1 // pred_check
      _
    $region3: #{lamb_update.1} parent=1 // pred_check_branch
      %11 = sbr.rel (0) target = $region5
    $region4: #{lamb_update.1} parent=1 // pred_region
      %s13 = ssub.s32 16, 16
      %14 = vsyncadd [#allocation3], %s13
      %s16 = sshll.u32 %s0, 4
      %s17 = int_to_ptr.vmem [resolvable:$true] %s16
      %19 = dma.vmem_to_smem %s17, 16, [#allocation2], [#allocation3]
    $region5: #{lamb_update.1} parent=1 // pred_fallthru
      _
    // Predicated region
    $region6: #{lamb_update.1} parent=1 // pred_check
      _
    $region7: #{lamb_update.1} parent=1 // pred_check_branch
      %21 = sbr.rel (0) target = $region9
    $region8: #{lamb_update.1} parent=1 // pred_region
      _
    $region9: #{lamb_update.1} parent=1 // pred_fallthru
      _
    // Predicated region
    $region10: #{lamb_update.1} parent=1 // pred_check
      _
    $region11: #{lamb_update.1} parent=1 // pred_check_branch
      %23 = sbr.rel (0) target = $region13
    $region12: #{lamb_update.1} parent=1 // pred_region
      _
    $region13: #{lamb_update.1} parent=1 // pred_fallthru
      _
    // Predicated region
    $region14: #{lamb_update.1} parent=1 // pred_check
      _
    $region15: #{lamb_update.1} parent=1 // pred_check_branch
      %25 = sbr.rel (0) target = $region17
    $region16: #{lamb_update.1} parent=1 // pred_region
      _
    $region17: #{lamb_update.1} parent=1 // pred_fallthru
      _
    // Predicated region
    $region18: #{lamb_update.1} parent=1 // pred_check
      _
    $region19: #{lamb_update.1} parent=1 // pred_check_branch
      %27 = sbr.rel (0) target = $region21
    $region20: #{lamb_update.1} parent=1 // pred_region
      %28 = dma.done [#allocation3], 16
    $region21: #{lamb_update.1} parent=1 // pred_fallthru
      _
    %29 = sfence
    %s30 = sld [smem:[#allocation2]]
    %s31 = sld [smem:[#allocation2 + $0x1]]
    %v32 = vld [vmem:[%s1] sm:$0xff]
    %v33 = vld [vmem:[%s1 + $0x8] sm:$0xff]
    %v34 = vld [vmem:[%s2] sm:$0xff]
    %v35 = vld [vmem:[%s2 + $0x8] sm:$0xff]
    %v36 = vld [vmem:[%s3] sm:$0xff]
    %v37 = vld [vmem:[%s3 + $0x8] sm:$0xff]
    %v38 = vrsqrt.pop %v36
    %v39 = vmul.f32 %v36, %v38
    %vm40 = vcmp.eq.f32.partialorder %v36, inf
    %v41 = vsel %vm40, %v36, %v39
    %vm42 = vcmp.eq.f32.partialorder %v36, 0.0
    %v43 = vand.u32 %v36, 2147483648
    %v44 = vsel %vm42, %v43, %v41
    %v45 = vrsqrt.pop %v37
    %v46 = vmul.f32 %v37, %v45
    %vm47 = vcmp.eq.f32.partialorder %v37, inf
    %v48 = vsel %vm47, %v37, %v46
    %vm49 = vcmp.eq.f32.partialorder %v37, 0.0
    %v50 = vand.u32 %v37, 2147483648
    %v51 = vsel %vm49, %v50, %v48
    %v52 = vstv %s31
    %v53 = vadd.f32 %v44, %v52
    %v54 = vadd.f32 %v51, %v52
    %v55 = vrcp.pop %v53
    %v56 = vmul.f32 %v34, %v55
    %v57 = vrcp.pop %v54
    %v58 = vmul.f32 %v35, %v57
    %v59 = vmul.f32 %v32, %v32
    %v60 = vmul.f32 %v33, %v33
    %v61 = vadd.f32 %v59, %v60
    %62 = vadd.xlane.f32.xlu0 %v61
    %v63 = vpop.xlane.xlu0 %62
    %v64 = vrot.slane %v63, 4
    %v65 = vadd.f32 %v63, %v64
    %v66 = vrot.slane %v65, 2
    %v67 = vadd.f32 %v65, %v66
    %v68 = vrot.slane %v67, 1
    %v69 = vadd.f32 %v67, %v68
    %s70 = vtos %v69
    %v71 = vstv %s70
    %v72 = vrsqrt.pop %v71
    %v73 = vmul.f32 %v71, %v72
    %vm74 = vcmp.eq.f32.partialorder %v71, inf
    %v75 = vsel %vm74, %v71, %v73
    %vm76 = vcmp.eq.f32.partialorder %v71, 0.0
    %v77 = vand.u32 %v71, 2147483648
    %v78 = vsel %vm76, %v77, %v75
    %s79 = vtos %v78
    %v80 = vmul.f32 %v56, %v56
    %v81 = vmul.f32 %v58, %v58
    %v82 = vadd.f32 %v80, %v81
    %83 = vadd.xlane.f32.xlu0 %v82
    %v84 = vpop.xlane.xlu0 %83
    %v85 = vrot.slane %v84, 4
    %v86 = vadd.f32 %v84, %v85
    %v87 = vrot.slane %v86, 2
    %v88 = vadd.f32 %v86, %v87
    %v89 = vrot.slane %v88, 1
    %v90 = vadd.f32 %v88, %v89
    %s91 = vtos %v90
    %v92 = vstv %s91
    %v93 = vrsqrt.pop %v92
    %v94 = vmul.f32 %v92, %v93
    %vm95 = vcmp.eq.f32.partialorder %v92, inf
    %v96 = vsel %vm95, %v92, %v94
    %vm97 = vcmp.eq.f32.partialorder %v92, 0.0
    %v98 = vand.u32 %v92, 2147483648
    %v99 = vsel %vm97, %v98, %v96
    %s100 = vtos %v99
    %s101 = sadd.f32 %s100, %s31
    %v102 = vstv %s101
    %v103 = vrcp.pop %v102
    %s104 = vtos %v103
    %s105 = smul.f32 %s79, %s104
    %s106 = smul.f32 %s30, %s105
    %v107 = vstv %s106
    %v108 = vmul.f32 %v107, %v56
    %v109 = vmul.f32 %v107, %v58
    %v110 = vsub.f32 %v32, %v108
    %v111 = vsub.f32 %v33, %v109
    %112 = vst [vmem:[%s4] sm:$0xff] %v110
    %113 = vst [vmem:[%s4 + $0x8] sm:$0xff] %v111
    // Predicated region
    $region22: #{lamb_update.1} parent=1 // pred_check
      _
    $region23: #{lamb_update.1} parent=1 // pred_check_branch
      %115 = sbr.rel (0) target = $region25
    $region24: #{lamb_update.1} parent=1 // pred_region
      _
    $region25: #{lamb_update.1} parent=1 // pred_fallthru
      _
    // Predicated region
    $region26: #{lamb_update.1} parent=1 // pred_check
      _
    $region27: #{lamb_update.1} parent=1 // pred_check_branch
      %117 = sbr.rel (0) target = $region29
    $region28: #{lamb_update.1} parent=1 // pred_region
      _
    $region29: #{lamb_update.1} parent=1 // pred_fallthru
      _
    %118 = vsyncpa [#allocation3], 1

</llo_original>
